<compile_context>
chip_gen: v5e
topology: v5e:2x2
jax: 0.10.0
libtpu: 0.0.40
codegen_flags: <defaults>
</compile_context>

<pallas_src>
import functools

import jax
import jax.numpy as jnp
from jax.experimental import pallas as pl
from jax.experimental.pallas import tpu as pltpu


def _gru_svm_kernel(x_ref, h0_ref, wih_ref, whh_ref, aux_ref,
                    y_ref,
                    gi_scr, h_all_scr,
                    *, seq_len, batch, hidden, unroll):
    T, B, H = seq_len, batch, hidden

    # ---- Fused input projection for all timesteps at once (off the sequential path).
    # x_ref is (T*B, 3) with a trailing ones column; wih_ref is (3, 3H) whose last row
    # holds the folded biases [b_ir+b_hr, b_iz+b_hz, b_in].
    gi_scr[...] = jnp.dot(x_ref[...], wih_ref[...],
                          preferred_element_type=jnp.float32).reshape(T, B, 3 * H)

    # Recurrent weights stay resident: one (H, 3H) tile, reused every step.
    whh = whh_ref[...]
    # Hoisted broadcasts (not CSE'd if left inside the unrolled loop).
    b_hn = jnp.broadcast_to(aux_ref[0:1, :], (B, H))        # (B, H)
    wout = aux_ref[1:2, :]                                   # (1, H)
    bout = aux_ref[2:3, 0:1]                                 # (1, 1)

    # ---- Sequential GRU recurrence: ONE fused matmul per timestep. ----
    def step(t, h):
        gi = gi_scr[t]                                       # (B, 3H)
        gh = jnp.dot(h, whh, preferred_element_type=jnp.float32)  # (B, 3H), single MXU op
        r = jax.nn.sigmoid(gi[:, 0:H] + gh[:, 0:H])
        z = jax.nn.sigmoid(gi[:, H:2 * H] + gh[:, H:2 * H])
        n = jnp.tanh(gi[:, 2 * H:3 * H] + r * (gh[:, 2 * H:3 * H] + b_hn))
        h_new = (1.0 - z) * n + z * h
        h_all_scr[t] = h_new
        return h_new

    jax.lax.fori_loop(0, T, step, h0_ref[...], unroll=unroll)

    # ---- Output head: Linear(H, 1) + sigmoid on the whole (T, B, H) slab at once. ----
    h_all = h_all_scr[...]                                   # (T, B, H)
    logits = jnp.sum(h_all * wout[None, :, :], axis=-1) + bout   # (T, B)
    y_ref[...] = jax.nn.sigmoid(logits)                      # (T, B)


def prepack_params(params):
    """One-time parameter packing (do NOT call per forward pass)."""
    H = int(params["w_hh"].shape[1])
    w_ih = params["w_ih"].astype(jnp.float32)                # (3H, 2)
    w_hh = params["w_hh"].astype(jnp.float32)                # (3H, H)
    b_ih = params["b_ih"].astype(jnp.float32)                # (3H,)
    b_hh = params["b_hh"].astype(jnp.float32)                # (3H,)

    # Column-concatenated, pre-transposed gate weights: [r | z | n].
    wih_cat = jnp.concatenate([w_ih[0:H].T, w_ih[H:2 * H].T, w_ih[2 * H:3 * H].T],
                              axis=1)                        # (2, 3H)
    # Fold b_hh[r], b_hh[z] into the input-projection biases; b_ih[n] rides along too.
    bias_row = jnp.concatenate([b_ih[0:H] + b_hh[0:H],
                                b_ih[H:2 * H] + b_hh[H:2 * H],
                                b_ih[2 * H:3 * H]])[None, :]  # (1, 3H)
    wih_aug = jnp.concatenate([wih_cat, bias_row], axis=0)    # (3, 3H)

    whh_cat = jnp.concatenate([w_hh[0:H].T, w_hh[H:2 * H].T, w_hh[2 * H:3 * H].T],
                              axis=1)                        # (H, 3H)

    # Aux slab: row 0 = b_hn (stays separate: r*(gh_n + b_hn)), row 1 = w_out,
    # row 2 = [b_out, 0, ..., 0].
    b_hn = b_hh[2 * H:3 * H]
    wout = params["w_out"].astype(jnp.float32).reshape(H)
    bout_row = jnp.concatenate([params["b_out"].astype(jnp.float32).reshape(1),
                                jnp.zeros((H - 1,), jnp.float32)])
    aux = jnp.stack([b_hn, wout, bout_row], axis=0)           # (3, H)

    return {"wih_aug": wih_aug, "whh_cat": whh_cat, "aux": aux, "hidden": H}


def gru_svm_forward(x_btc, h_1bh, packed):
    """x_btc: (B, T, 2) float32, h_1bh: (1, B, H) float32 -> y: (B, T, 1)."""
    B, T, I = x_btc.shape
    H = packed["hidden"]
    assert I == 2

    B_pad = ((B + 7) // 8) * 8                               # sublane multiple

    x_tbc = jnp.transpose(x_btc, (1, 0, 2)).astype(jnp.float32)   # (T, B, 2)
    h0 = h_1bh[0].astype(jnp.float32)                              # (B, H)
    if B_pad != B:
        x_tbc = jnp.pad(x_tbc, ((0, 0), (0, B_pad - B), (0, 0)))
        h0 = jnp.pad(h0, ((0, B_pad - B), (0, 0)))
    # Append a ones column so the folded biases come in via the weight matmul.
    x_aug = jnp.concatenate(
        [x_tbc, jnp.ones((T, B_pad, 1), jnp.float32)], axis=-1
    ).reshape(T * B_pad, I + 1)                                    # (T*B_pad, 3)

    kernel = functools.partial(_gru_svm_kernel, seq_len=T, batch=B_pad, hidden=H,
                               unroll=(True if T <= 16 else 8))

    def full(shape):
        return pl.BlockSpec(shape, lambda i: (0,) * len(shape))

    y_tb = pl.pallas_call(
        kernel,
        out_shape=jax.ShapeDtypeStruct((T, B_pad), jnp.float32),
        grid_spec=pltpu.PrefetchScalarGridSpec(
            num_scalar_prefetch=0,
            grid=(1,),                                 # single step; loop is in-kernel
            in_specs=[
                full((T * B_pad, I + 1)),              # x_aug (all timesteps + ones col)
                full((B_pad, H)),                      # h0
                full((I + 1, 3 * H)),                  # W_ih_aug (weights + folded bias row)
                full((H, 3 * H)),                      # W_hh_cat
                full((3, H)),                          # aux: [b_hn; w_out; b_out...]
            ],
            out_specs=full((T, B_pad)),
            scratch_shapes=[
                pltpu.VMEM((T, B_pad, 3 * H), jnp.float32),   # fused gi for all t
                pltpu.VMEM((T, B_pad, H), jnp.float32),       # h_t for all t
            ],
        ),
        compiler_params=pltpu.CompilerParams(
            dimension_semantics=("arbitrary",),
        ),
    )(x_aug, h0, packed["wih_aug"], packed["whh_cat"], packed["aux"])

    # (T, B_pad) -> (B, T, 1), dropping batch padding.
    return jnp.transpose(y_tb[:, :B], (1, 0))[:, :, None]


def _reference_forward(x_btc, h_1bh, params):
    """Pure-JAX reference matching torch.nn.GRU semantics (gate order r,z,n)."""
    H = params["w_hh"].shape[1]
    wih, whh = params["w_ih"], params["w_hh"]
    bih, bhh = params["b_ih"], params["b_hh"]
    wout, bout = params["w_out"], params["b_out"]

    def cell(h, x_t):
        gi = x_t @ wih.T + bih
        gh = h @ whh.T + bhh
        r = jax.nn.sigmoid(gi[:, :H] + gh[:, :H])
        z = jax.nn.sigmoid(gi[:, H:2 * H] + gh[:, H:2 * H])
        n = jnp.tanh(gi[:, 2 * H:] + r * gh[:, 2 * H:])
        h_new = (1.0 - z) * n + z * h
        return h_new, h_new

    x_tbc = jnp.transpose(x_btc, (1, 0, 2))
    _, hs = jax.lax.scan(cell, h_1bh[0], x_tbc)     # (T, B, H)
    y = jax.nn.sigmoid(hs @ wout.T + bout)          # (T, B, 1)
    return jnp.transpose(y, (1, 0, 2))


def init_params(key, hidden_size):
    H = hidden_size
    stdv = 1.0 / jnp.sqrt(jnp.float32(H))
    ks = jax.random.split(key, 6)
    uni = lambda k, shape: jax.random.uniform(k, shape, jnp.float32, -stdv, stdv)
    return {
        "w_ih": uni(ks[0], (3 * H, 2)),
        "w_hh": uni(ks[1], (3 * H, H)),
        "b_ih": uni(ks[2], (3 * H,)),
        "b_hh": uni(ks[3], (3 * H,)),
        "w_out": uni(ks[4], (1, H)),
        "b_out": uni(ks[5], (1,)),
    }


if __name__ == "__main__":
    B, T, H = 4, 8, 32
    key = jax.random.PRNGKey(0)
    k_p, k_x, k_h = jax.random.split(key, 3)

    params = init_params(k_p, H)
    packed = prepack_params(params)                           # one-time pre-pack

    x = jax.random.normal(k_x, (B, T, 2), jnp.float32)        # batch_first input
    h0 = jax.random.normal(k_h, (1, B, H), jnp.float32)       # initial hidden state

    y = jax.block_until_ready(gru_svm_forward(x, h0, packed))

    y_ref = jax.block_until_ready(_reference_forward(x, h0, params))
    assert y.shape == (B, T, 1)
    assert jnp.max(jnp.abs(y - y_ref)) < 1e-5

    print("KERNEL_OK")
</pallas_src>

<mosaic_0001>
module attributes {stable_mosaic.version = 11 : i64} {
  func.func @_gru_svm_kernel(%arg0: i32, %arg1: memref<64x3xf32, #tpu.memory_space<vmem>>, %arg2: memref<8x32xf32, #tpu.memory_space<vmem>>, %arg3: memref<3x96xf32, #tpu.memory_space<vmem>>, %arg4: memref<32x96xf32, #tpu.memory_space<vmem>>, %arg5: memref<3x32xf32, #tpu.memory_space<vmem>>, %arg6: memref<8x8xf32, #tpu.memory_space<vmem>>, %arg7: memref<8x8x96xf32, #tpu.memory_space<vmem>>, %arg8: memref<8x8x32xf32, #tpu.memory_space<vmem>>) attributes {dimension_semantics = [#tpu.dimension_semantics<arbitrary>], iteration_bounds = array<i64: 1>, scalar_prefetch = 0 : i64, scratch_operands = 2 : i64, tpu.core_type = #tpu.core_type<tc>, window_params = [{pipeline_mode = #tpu.pipeline_mode<synchronous>, transform_indices = @transform_0, window_bounds = array<i64: 64, 3>}, {pipeline_mode = #tpu.pipeline_mode<synchronous>, transform_indices = @transform_1, window_bounds = array<i64: 8, 32>}, {pipeline_mode = #tpu.pipeline_mode<synchronous>, transform_indices = @transform_2, window_bounds = array<i64: 3, 96>}, {pipeline_mode = #tpu.pipeline_mode<synchronous>, transform_indices = @transform_3, window_bounds = array<i64: 32, 96>}, {pipeline_mode = #tpu.pipeline_mode<synchronous>, transform_indices = @transform_4, window_bounds = array<i64: 3, 32>}, {pipeline_mode = #tpu.pipeline_mode<synchronous>, transform_indices = @transform_5, window_bounds = array<i64: 8, 8>}]} {
    %c0 = arith.constant 0 : index
    %c0_0 = arith.constant 0 : index
    %0 = vector.load %arg1[%c0, %c0_0] : memref<64x3xf32, #tpu.memory_space<vmem>>, vector<64x3xf32>
    %c0_1 = arith.constant 0 : index
    %c0_2 = arith.constant 0 : index
    %1 = vector.load %arg3[%c0_1, %c0_2] : memref<3x96xf32, #tpu.memory_space<vmem>>, vector<3x96xf32>
    %cst = arith.constant dense<0.000000e+00> : vector<64x96xf32>
    %2 = tpu.matmul %0, %1, %cst {dimension_numbers = #tpu.dot_dimension_numbers<[1], [0], [0], [1], [0, 0, 1, 1], [], []>} : vector<64x3xf32>, vector<3x96xf32>, vector<64x96xf32> -> vector<64x96xf32>
    %3 = vector.shape_cast %2 : vector<64x96xf32> to vector<8x8x96xf32>
    %c0_3 = arith.constant 0 : index
    %c0_4 = arith.constant 0 : index
    %c0_5 = arith.constant 0 : index
    %4 = vector.load %arg7[%c0_3, %c0_4, %c0_5] : memref<8x8x96xf32, #tpu.memory_space<vmem>>, vector<8x8x96xf32>
    tpu.vector_store %arg7[%c0_3, %c0_4, %c0_5], %3 {strides = array<i32>} : memref<8x8x96xf32, #tpu.memory_space<vmem>>, vector<8x8x96xf32>,
    %c0_6 = arith.constant 0 : index
    %c0_7 = arith.constant 0 : index
    %5 = vector.load %arg4[%c0_6, %c0_7] : memref<32x96xf32, #tpu.memory_space<vmem>>, vector<32x96xf32>
    %c0_8 = arith.constant 0 : index
    %c0_9 = arith.constant 0 : index
    %6 = vector.load %arg5[%c0_8, %c0_9] : memref<3x32xf32, #tpu.memory_space<vmem>>, vector<1x32xf32>
    %7 = vector.shape_cast %6 : vector<1x32xf32> to vector<1x32xf32>
    %8 = vector.broadcast %7 : vector<1x32xf32> to vector<8x32xf32>
    %c1 = arith.constant 1 : index
    %c0_10 = arith.constant 0 : index
    %9 = vector.load %arg5[%c1, %c0_10] : memref<3x32xf32, #tpu.memory_space<vmem>>, vector<1x32xf32>
    %c2 = arith.constant 2 : index
    %c0_11 = arith.constant 0 : index
    %10 = vector.load %arg5[%c2, %c0_11] : memref<3x32xf32, #tpu.memory_space<vmem>>, vector<1x1xf32>
    %c0_12 = arith.constant 0 : index
    %c0_13 = arith.constant 0 : index
    %11 = vector.load %arg2[%c0_12, %c0_13] : memref<8x32xf32, #tpu.memory_space<vmem>>, vector<8x32xf32>
    %c0_i32 = arith.constant 0 : i32
    %12 = arith.index_cast %c0_i32 : i32 to index
    %c0_14 = arith.constant 0 : index
    %c0_15 = arith.constant 0 : index
    %13 = vector.load %arg7[%12, %c0_14, %c0_15] : memref<8x8x96xf32, #tpu.memory_space<vmem>>, vector<1x8x96xf32>
    %14 = vector.shape_cast %13 : vector<1x8x96xf32> to vector<8x96xf32>
    %cst_16 = arith.constant dense<0.000000e+00> : vector<8x96xf32>
    %15 = tpu.matmul %11, %5, %cst_16 {dimension_numbers = #tpu.dot_dimension_numbers<[1], [0], [0], [1], [0, 0, 1, 1], [], []>} : vector<8x32xf32>, vector<32x96xf32>, vector<8x96xf32> -> vector<8x96xf32>
    %16 = vector.extract_strided_slice %14 {offsets = [0, 0], sizes = [8, 32], strides = [1, 1]} : vector<8x96xf32> to vector<8x32xf32>
    %17 = vector.extract_strided_slice %15 {offsets = [0, 0], sizes = [8, 32], strides = [1, 1]} : vector<8x96xf32> to vector<8x32xf32>
    %18 = arith.addf %16, %17 : vector<8x32xf32>
    %19 = arith.negf %18 : vector<8x32xf32>
    %20 = math.exp %19 : vector<8x32xf32>
    %cst_17 = arith.constant 1.000000e+00 : f32
    %21 = vector.broadcast %cst_17 : f32 to vector<8x32xf32>
    %22 = arith.addf %21, %20 : vector<8x32xf32>
    %23 = arith.divf %21, %22 : vector<8x32xf32>
    %24 = vector.extract_strided_slice %14 {offsets = [0, 32], sizes = [8, 32], strides = [1, 1]} : vector<8x96xf32> to vector<8x32xf32>
    %25 = vector.extract_strided_slice %15 {offsets = [0, 32], sizes = [8, 32], strides = [1, 1]} : vector<8x96xf32> to vector<8x32xf32>
    %26 = arith.addf %24, %25 : vector<8x32xf32>
    %27 = arith.negf %26 : vector<8x32xf32>
    %28 = math.exp %27 : vector<8x32xf32>
    %cst_18 = arith.constant 1.000000e+00 : f32
    %29 = vector.broadcast %cst_18 : f32 to vector<8x32xf32>
    %30 = arith.addf %29, %28 : vector<8x32xf32>
    %31 = arith.divf %29, %30 : vector<8x32xf32>
    %32 = vector.extract_strided_slice %14 {offsets = [0, 64], sizes = [8, 32], strides = [1, 1]} : vector<8x96xf32> to vector<8x32xf32>
    %33 = vector.extract_strided_slice %15 {offsets = [0, 64], sizes = [8, 32], strides = [1, 1]} : vector<8x96xf32> to vector<8x32xf32>
    %34 = arith.addf %33, %8 : vector<8x32xf32>
    %35 = arith.mulf %23, %34 : vector<8x32xf32>
    %36 = arith.addf %32, %35 : vector<8x32xf32>
    %37 = math.tanh %36 : vector<8x32xf32>
    %cst_19 = arith.constant 1.000000e+00 : f32
    %38 = vector.broadcast %cst_19 : f32 to vector<8x32xf32>
    %39 = arith.subf %38, %31 : vector<8x32xf32>
    %40 = arith.mulf %39, %37 : vector<8x32xf32>
    %41 = arith.mulf %31, %11 : vector<8x32xf32>
    %42 = arith.addf %40, %41 : vector<8x32xf32>
    %43 = arith.index_cast %c0_i32 : i32 to index
    %c0_20 = arith.constant 0 : index
    %c0_21 = arith.constant 0 : index
    %44 = vector.load %arg8[%43, %c0_20, %c0_21] : memref<8x8x32xf32, #tpu.memory_space<vmem>>, vector<1x8x32xf32>
    %45 = vector.shape_cast %44 : vector<1x8x32xf32> to vector<8x32xf32>
    %46 = vector.shape_cast %42 : vector<8x32xf32> to vector<1x8x32xf32>
    tpu.vector_store %arg8[%43, %c0_20, %c0_21], %46 {strides = array<i32>} : memref<8x8x32xf32, #tpu.memory_space<vmem>>, vector<1x8x32xf32>,
    %c1_i32 = arith.constant 1 : i32
    %47 = arith.index_cast %c1_i32 : i32 to index
    %c0_22 = arith.constant 0 : index
    %c0_23 = arith.constant 0 : index
    %48 = vector.load %arg7[%47, %c0_22, %c0_23] : memref<8x8x96xf32, #tpu.memory_space<vmem>>, vector<1x8x96xf32>
    %49 = vector.shape_cast %48 : vector<1x8x96xf32> to vector<8x96xf32>
    %cst_24 = arith.constant dense<0.000000e+00> : vector<8x96xf32>
    %50 = tpu.matmul %42, %5, %cst_24 {dimension_numbers = #tpu.dot_dimension_numbers<[1], [0], [0], [1], [0, 0, 1, 1], [], []>} : vector<8x32xf32>, vector<32x96xf32>, vector<8x96xf32> -> vector<8x96xf32>
    %51 = vector.extract_strided_slice %49 {offsets = [0, 0], sizes = [8, 32], strides = [1, 1]} : vector<8x96xf32> to vector<8x32xf32>
    %52 = vector.extract_strided_slice %50 {offsets = [0, 0], sizes = [8, 32], strides = [1, 1]} : vector<8x96xf32> to vector<8x32xf32>
    %53 = arith.addf %51, %52 : vector<8x32xf32>
    %54 = arith.negf %53 : vector<8x32xf32>
    %55 = math.exp %54 : vector<8x32xf32>
    %cst_25 = arith.constant 1.000000e+00 : f32
    %56 = vector.broadcast %cst_25 : f32 to vector<8x32xf32>
    %57 = arith.addf %56, %55 : vector<8x32xf32>
    %58 = arith.divf %56, %57 : vector<8x32xf32>
    %59 = vector.extract_strided_slice %49 {offsets = [0, 32], sizes = [8, 32], strides = [1, 1]} : vector<8x96xf32> to vector<8x32xf32>
    %60 = vector.extract_strided_slice %50 {offsets = [0, 32], sizes = [8, 32], strides = [1, 1]} : vector<8x96xf32> to vector<8x32xf32>
    %61 = arith.addf %59, %60 : vector<8x32xf32>
    %62 = arith.negf %61 : vector<8x32xf32>
    %63 = math.exp %62 : vector<8x32xf32>
    %cst_26 = arith.constant 1.000000e+00 : f32
    %64 = vector.broadcast %cst_26 : f32 to vector<8x32xf32>
    %65 = arith.addf %64, %63 : vector<8x32xf32>
    %66 = arith.divf %64, %65 : vector<8x32xf32>
    %67 = vector.extract_strided_slice %49 {offsets = [0, 64], sizes = [8, 32], strides = [1, 1]} : vector<8x96xf32> to vector<8x32xf32>
    %68 = vector.extract_strided_slice %50 {offsets = [0, 64], sizes = [8, 32], strides = [1, 1]} : vector<8x96xf32> to vector<8x32xf32>
    %69 = arith.addf %68, %8 : vector<8x32xf32>
    %70 = arith.mulf %58, %69 : vector<8x32xf32>
    %71 = arith.addf %67, %70 : vector<8x32xf32>
    %72 = math.tanh %71 : vector<8x32xf32>
    %cst_27 = arith.constant 1.000000e+00 : f32
    %73 = vector.broadcast %cst_27 : f32 to vector<8x32xf32>
    %74 = arith.subf %73, %66 : vector<8x32xf32>
    %75 = arith.mulf %74, %72 : vector<8x32xf32>
    %76 = arith.mulf %66, %42 : vector<8x32xf32>
    %77 = arith.addf %75, %76 : vector<8x32xf32>
    %78 = arith.index_cast %c1_i32 : i32 to index
    %c0_28 = arith.constant 0 : index
    %c0_29 = arith.constant 0 : index
    %79 = vector.load %arg8[%78, %c0_28, %c0_29] : memref<8x8x32xf32, #tpu.memory_space<vmem>>, vector<1x8x32xf32>
    %80 = vector.shape_cast %79 : vector<1x8x32xf32> to vector<8x32xf32>
    %81 = vector.shape_cast %77 : vector<8x32xf32> to vector<1x8x32xf32>
    tpu.vector_store %arg8[%78, %c0_28, %c0_29], %81 {strides = array<i32>} : memref<8x8x32xf32, #tpu.memory_space<vmem>>, vector<1x8x32xf32>,
    %c2_i32 = arith.constant 2 : i32
    %82 = arith.index_cast %c2_i32 : i32 to index
    %c0_30 = arith.constant 0 : index
    %c0_31 = arith.constant 0 : index
    %83 = vector.load %arg7[%82, %c0_30, %c0_31] : memref<8x8x96xf32, #tpu.memory_space<vmem>>, vector<1x8x96xf32>
    %84 = vector.shape_cast %83 : vector<1x8x96xf32> to vector<8x96xf32>
    %cst_32 = arith.constant dense<0.000000e+00> : vector<8x96xf32>
    %85 = tpu.matmul %77, %5, %cst_32 {dimension_numbers = #tpu.dot_dimension_numbers<[1], [0], [0], [1], [0, 0, 1, 1], [], []>} : vector<8x32xf32>, vector<32x96xf32>, vector<8x96xf32> -> vector<8x96xf32>
    %86 = vector.extract_strided_slice %84 {offsets = [0, 0], sizes = [8, 32], strides = [1, 1]} : vector<8x96xf32> to vector<8x32xf32>
    %87 = vector.extract_strided_slice %85 {offsets = [0, 0], sizes = [8, 32], strides = [1, 1]} : vector<8x96xf32> to vector<8x32xf32>
    %88 = arith.addf %86, %87 : vector<8x32xf32>
    %89 = arith.negf %88 : vector<8x32xf32>
    %90 = math.exp %89 : vector<8x32xf32>
    %cst_33 = arith.constant 1.000000e+00 : f32
    %91 = vector.broadcast %cst_33 : f32 to vector<8x32xf32>
    %92 = arith.addf %91, %90 : vector<8x32xf32>
    %93 = arith.divf %91, %92 : vector<8x32xf32>
    %94 = vector.extract_strided_slice %84 {offsets = [0, 32], sizes = [8, 32], strides = [1, 1]} : vector<8x96xf32> to vector<8x32xf32>
    %95 = vector.extract_strided_slice %85 {offsets = [0, 32], sizes = [8, 32], strides = [1, 1]} : vector<8x96xf32> to vector<8x32xf32>
    %96 = arith.addf %94, %95 : vector<8x32xf32>
    %97 = arith.negf %96 : vector<8x32xf32>
    %98 = math.exp %97 : vector<8x32xf32>
    %cst_34 = arith.constant 1.000000e+00 : f32
    %99 = vector.broadcast %cst_34 : f32 to vector<8x32xf32>
    %100 = arith.addf %99, %98 : vector<8x32xf32>
    %101 = arith.divf %99, %100 : vector<8x32xf32>
    %102 = vector.extract_strided_slice %84 {offsets = [0, 64], sizes = [8, 32], strides = [1, 1]} : vector<8x96xf32> to vector<8x32xf32>
    %103 = vector.extract_strided_slice %85 {offsets = [0, 64], sizes = [8, 32], strides = [1, 1]} : vector<8x96xf32> to vector<8x32xf32>
    %104 = arith.addf %103, %8 : vector<8x32xf32>
    %105 = arith.mulf %93, %104 : vector<8x32xf32>
    %106 = arith.addf %102, %105 : vector<8x32xf32>
    %107 = math.tanh %106 : vector<8x32xf32>
    %cst_35 = arith.constant 1.000000e+00 : f32
    %108 = vector.broadcast %cst_35 : f32 to vector<8x32xf32>
    %109 = arith.subf %108, %101 : vector<8x32xf32>
    %110 = arith.mulf %109, %107 : vector<8x32xf32>
    %111 = arith.mulf %101, %77 : vector<8x32xf32>
    %112 = arith.addf %110, %111 : vector<8x32xf32>
    %113 = arith.index_cast %c2_i32 : i32 to index
    %c0_36 = arith.constant 0 : index
    %c0_37 = arith.constant 0 : index
    %114 = vector.load %arg8[%113, %c0_36, %c0_37] : memref<8x8x32xf32, #tpu.memory_space<vmem>>, vector<1x8x32xf32>
    %115 = vector.shape_cast %114 : vector<1x8x32xf32> to vector<8x32xf32>
    %116 = vector.shape_cast %112 : vector<8x32xf32> to vector<1x8x32xf32>
    tpu.vector_store %arg8[%113, %c0_36, %c0_37], %116 {strides = array<i32>} : memref<8x8x32xf32, #tpu.memory_space<vmem>>, vector<1x8x32xf32>,
    %c3_i32 = arith.constant 3 : i32
    %117 = arith.index_cast %c3_i32 : i32 to index
    %c0_38 = arith.constant 0 : index
    %c0_39 = arith.constant 0 : index
    %118 = vector.load %arg7[%117, %c0_38, %c0_39] : memref<8x8x96xf32, #tpu.memory_space<vmem>>, vector<1x8x96xf32>
    %119 = vector.shape_cast %118 : vector<1x8x96xf32> to vector<8x96xf32>
    %cst_40 = arith.constant dense<0.000000e+00> : vector<8x96xf32>
    %120 = tpu.matmul %112, %5, %cst_40 {dimension_numbers = #tpu.dot_dimension_numbers<[1], [0], [0], [1], [0, 0, 1, 1], [], []>} : vector<8x32xf32>, vector<32x96xf32>, vector<8x96xf32> -> vector<8x96xf32>
    %121 = vector.extract_strided_slice %119 {offsets = [0, 0], sizes = [8, 32], strides = [1, 1]} : vector<8x96xf32> to vector<8x32xf32>
    %122 = vector.extract_strided_slice %120 {offsets = [0, 0], sizes = [8, 32], strides = [1, 1]} : vector<8x96xf32> to vector<8x32xf32>
    %123 = arith.addf %121, %122 : vector<8x32xf32>
    %124 = arith.negf %123 : vector<8x32xf32>
    %125 = math.exp %124 : vector<8x32xf32>
    %cst_41 = arith.constant 1.000000e+00 : f32
    %126 = vector.broadcast %cst_41 : f32 to vector<8x32xf32>
    %127 = arith.addf %126, %125 : vector<8x32xf32>
    %128 = arith.divf %126, %127 : vector<8x32xf32>
    %129 = vector.extract_strided_slice %119 {offsets = [0, 32], sizes = [8, 32], strides = [1, 1]} : vector<8x96xf32> to vector<8x32xf32>
    %130 = vector.extract_strided_slice %120 {offsets = [0, 32], sizes = [8, 32], strides = [1, 1]} : vector<8x96xf32> to vector<8x32xf32>
    %131 = arith.addf %129, %130 : vector<8x32xf32>
    %132 = arith.negf %131 : vector<8x32xf32>
    %133 = math.exp %132 : vector<8x32xf32>
    %cst_42 = arith.constant 1.000000e+00 : f32
    %134 = vector.broadcast %cst_42 : f32 to vector<8x32xf32>
    %135 = arith.addf %134, %133 : vector<8x32xf32>
    %136 = arith.divf %134, %135 : vector<8x32xf32>
    %137 = vector.extract_strided_slice %119 {offsets = [0, 64], sizes = [8, 32], strides = [1, 1]} : vector<8x96xf32> to vector<8x32xf32>
    %138 = vector.extract_strided_slice %120 {offsets = [0, 64], sizes = [8, 32], strides = [1, 1]} : vector<8x96xf32> to vector<8x32xf32>
    %139 = arith.addf %138, %8 : vector<8x32xf32>
    %140 = arith.mulf %128, %139 : vector<8x32xf32>
    %141 = arith.addf %137, %140 : vector<8x32xf32>
    %142 = math.tanh %141 : vector<8x32xf32>
    %cst_43 = arith.constant 1.000000e+00 : f32
    %143 = vector.broadcast %cst_43 : f32 to vector<8x32xf32>
    %144 = arith.subf %143, %136 : vector<8x32xf32>
    %145 = arith.mulf %144, %142 : vector<8x32xf32>
    %146 = arith.mulf %136, %112 : vector<8x32xf32>
    %147 = arith.addf %145, %146 : vector<8x32xf32>
    %148 = arith.index_cast %c3_i32 : i32 to index
    %c0_44 = arith.constant 0 : index
    %c0_45 = arith.constant 0 : index
    %149 = vector.load %arg8[%148, %c0_44, %c0_45] : memref<8x8x32xf32, #tpu.memory_space<vmem>>, vector<1x8x32xf32>
    %150 = vector.shape_cast %149 : vector<1x8x32xf32> to vector<8x32xf32>
    %151 = vector.shape_cast %147 : vector<8x32xf32> to vector<1x8x32xf32>
    tpu.vector_store %arg8[%148, %c0_44, %c0_45], %151 {strides = array<i32>} : memref<8x8x32xf32, #tpu.memory_space<vmem>>, vector<1x8x32xf32>,
    %c4_i32 = arith.constant 4 : i32
    %152 = arith.index_cast %c4_i32 : i32 to index
    %c0_46 = arith.constant 0 : index
    %c0_47 = arith.constant 0 : index
    %153 = vector.load %arg7[%152, %c0_46, %c0_47] : memref<8x8x96xf32, #tpu.memory_space<vmem>>, vector<1x8x96xf32>
    %154 = vector.shape_cast %153 : vector<1x8x96xf32> to vector<8x96xf32>
    %cst_48 = arith.constant dense<0.000000e+00> : vector<8x96xf32>
    %155 = tpu.matmul %147, %5, %cst_48 {dimension_numbers = #tpu.dot_dimension_numbers<[1], [0], [0], [1], [0, 0, 1, 1], [], []>} : vector<8x32xf32>, vector<32x96xf32>, vector<8x96xf32> -> vector<8x96xf32>
    %156 = vector.extract_strided_slice %154 {offsets = [0, 0], sizes = [8, 32], strides = [1, 1]} : vector<8x96xf32> to vector<8x32xf32>
    %157 = vector.extract_strided_slice %155 {offsets = [0, 0], sizes = [8, 32], strides = [1, 1]} : vector<8x96xf32> to vector<8x32xf32>
    %158 = arith.addf %156, %157 : vector<8x32xf32>
    %159 = arith.negf %158 : vector<8x32xf32>
    %160 = math.exp %159 : vector<8x32xf32>
    %cst_49 = arith.constant 1.000000e+00 : f32
    %161 = vector.broadcast %cst_49 : f32 to vector<8x32xf32>
    %162 = arith.addf %161, %160 : vector<8x32xf32>
    %163 = arith.divf %161, %162 : vector<8x32xf32>
    %164 = vector.extract_strided_slice %154 {offsets = [0, 32], sizes = [8, 32], strides = [1, 1]} : vector<8x96xf32> to vector<8x32xf32>
    %165 = vector.extract_strided_slice %155 {offsets = [0, 32], sizes = [8, 32], strides = [1, 1]} : vector<8x96xf32> to vector<8x32xf32>
    %166 = arith.addf %164, %165 : vector<8x32xf32>
    %167 = arith.negf %166 : vector<8x32xf32>
    %168 = math.exp %167 : vector<8x32xf32>
    %cst_50 = arith.constant 1.000000e+00 : f32
    %169 = vector.broadcast %cst_50 : f32 to vector<8x32xf32>
    %170 = arith.addf %169, %168 : vector<8x32xf32>
    %171 = arith.divf %169, %170 : vector<8x32xf32>
    %172 = vector.extract_strided_slice %154 {offsets = [0, 64], sizes = [8, 32], strides = [1, 1]} : vector<8x96xf32> to vector<8x32xf32>
    %173 = vector.extract_strided_slice %155 {offsets = [0, 64], sizes = [8, 32], strides = [1, 1]} : vector<8x96xf32> to vector<8x32xf32>
    %174 = arith.addf %173, %8 : vector<8x32xf32>
    %175 = arith.mulf %163, %174 : vector<8x32xf32>
    %176 = arith.addf %172, %175 : vector<8x32xf32>
    %177 = math.tanh %176 : vector<8x32xf32>
    %cst_51 = arith.constant 1.000000e+00 : f32
    %178 = vector.broadcast %cst_51 : f32 to vector<8x32xf32>
    %179 = arith.subf %178, %171 : vector<8x32xf32>
    %180 = arith.mulf %179, %177 : vector<8x32xf32>
    %181 = arith.mulf %171, %147 : vector<8x32xf32>
    %182 = arith.addf %180, %181 : vector<8x32xf32>
    %183 = arith.index_cast %c4_i32 : i32 to index
    %c0_52 = arith.constant 0 : index
    %c0_53 = arith.constant 0 : index
    %184 = vector.load %arg8[%183, %c0_52, %c0_53] : memref<8x8x32xf32, #tpu.memory_space<vmem>>, vector<1x8x32xf32>
    %185 = vector.shape_cast %184 : vector<1x8x32xf32> to vector<8x32xf32>
    %186 = vector.shape_cast %182 : vector<8x32xf32> to vector<1x8x32xf32>
    tpu.vector_store %arg8[%183, %c0_52, %c0_53], %186 {strides = array<i32>} : memref<8x8x32xf32, #tpu.memory_space<vmem>>, vector<1x8x32xf32>,
    %c5_i32 = arith.constant 5 : i32
    %187 = arith.index_cast %c5_i32 : i32 to index
    %c0_54 = arith.constant 0 : index
    %c0_55 = arith.constant 0 : index
    %188 = vector.load %arg7[%187, %c0_54, %c0_55] : memref<8x8x96xf32, #tpu.memory_space<vmem>>, vector<1x8x96xf32>
    %189 = vector.shape_cast %188 : vector<1x8x96xf32> to vector<8x96xf32>
    %cst_56 = arith.constant dense<0.000000e+00> : vector<8x96xf32>
    %190 = tpu.matmul %182, %5, %cst_56 {dimension_numbers = #tpu.dot_dimension_numbers<[1], [0], [0], [1], [0, 0, 1, 1], [], []>} : vector<8x32xf32>, vector<32x96xf32>, vector<8x96xf32> -> vector<8x96xf32>
    %191 = vector.extract_strided_slice %189 {offsets = [0, 0], sizes = [8, 32], strides = [1, 1]} : vector<8x96xf32> to vector<8x32xf32>
    %192 = vector.extract_strided_slice %190 {offsets = [0, 0], sizes = [8, 32], strides = [1, 1]} : vector<8x96xf32> to vector<8x32xf32>
    %193 = arith.addf %191, %192 : vector<8x32xf32>
    %194 = arith.negf %193 : vector<8x32xf32>
    %195 = math.exp %194 : vector<8x32xf32>
    %cst_57 = arith.constant 1.000000e+00 : f32
    %196 = vector.broadcast %cst_57 : f32 to vector<8x32xf32>
    %197 = arith.addf %196, %195 : vector<8x32xf32>
    %198 = arith.divf %196, %197 : vector<8x32xf32>
    %199 = vector.extract_strided_slice %189 {offsets = [0, 32], sizes = [8, 32], strides = [1, 1]} : vector<8x96xf32> to vector<8x32xf32>
    %200 = vector.extract_strided_slice %190 {offsets = [0, 32], sizes = [8, 32], strides = [1, 1]} : vector<8x96xf32> to vector<8x32xf32>
    %201 = arith.addf %199, %200 : vector<8x32xf32>
    %202 = arith.negf %201 : vector<8x32xf32>
    %203 = math.exp %202 : vector<8x32xf32>
    %cst_58 = arith.constant 1.000000e+00 : f32
    %204 = vector.broadcast %cst_58 : f32 to vector<8x32xf32>
    %205 = arith.addf %204, %203 : vector<8x32xf32>
    %206 = arith.divf %204, %205 : vector<8x32xf32>
    %207 = vector.extract_strided_slice %189 {offsets = [0, 64], sizes = [8, 32], strides = [1, 1]} : vector<8x96xf32> to vector<8x32xf32>
    %208 = vector.extract_strided_slice %190 {offsets = [0, 64], sizes = [8, 32], strides = [1, 1]} : vector<8x96xf32> to vector<8x32xf32>
    %209 = arith.addf %208, %8 : vector<8x32xf32>
    %210 = arith.mulf %198, %209 : vector<8x32xf32>
    %211 = arith.addf %207, %210 : vector<8x32xf32>
    %212 = math.tanh %211 : vector<8x32xf32>
    %cst_59 = arith.constant 1.000000e+00 : f32
    %213 = vector.broadcast %cst_59 : f32 to vector<8x32xf32>
    %214 = arith.subf %213, %206 : vector<8x32xf32>
    %215 = arith.mulf %214, %212 : vector<8x32xf32>
    %216 = arith.mulf %206, %182 : vector<8x32xf32>
    %217 = arith.addf %215, %216 : vector<8x32xf32>
    %218 = arith.index_cast %c5_i32 : i32 to index
    %c0_60 = arith.constant 0 : index
    %c0_61 = arith.constant 0 : index
    %219 = vector.load %arg8[%218, %c0_60, %c0_61] : memref<8x8x32xf32, #tpu.memory_space<vmem>>, vector<1x8x32xf32>
    %220 = vector.shape_cast %219 : vector<1x8x32xf32> to vector<8x32xf32>
    %221 = vector.shape_cast %217 : vector<8x32xf32> to vector<1x8x32xf32>
    tpu.vector_store %arg8[%218, %c0_60, %c0_61], %221 {strides = array<i32>} : memref<8x8x32xf32, #tpu.memory_space<vmem>>, vector<1x8x32xf32>,
    %c6_i32 = arith.constant 6 : i32
    %222 = arith.index_cast %c6_i32 : i32 to index
    %c0_62 = arith.constant 0 : index
    %c0_63 = arith.constant 0 : index
    %223 = vector.load %arg7[%222, %c0_62, %c0_63] : memref<8x8x96xf32, #tpu.memory_space<vmem>>, vector<1x8x96xf32>
    %224 = vector.shape_cast %223 : vector<1x8x96xf32> to vector<8x96xf32>
    %cst_64 = arith.constant dense<0.000000e+00> : vector<8x96xf32>
    %225 = tpu.matmul %217, %5, %cst_64 {dimension_numbers = #tpu.dot_dimension_numbers<[1], [0], [0], [1], [0, 0, 1, 1], [], []>} : vector<8x32xf32>, vector<32x96xf32>, vector<8x96xf32> -> vector<8x96xf32>
    %226 = vector.extract_strided_slice %224 {offsets = [0, 0], sizes = [8, 32], strides = [1, 1]} : vector<8x96xf32> to vector<8x32xf32>
    %227 = vector.extract_strided_slice %225 {offsets = [0, 0], sizes = [8, 32], strides = [1, 1]} : vector<8x96xf32> to vector<8x32xf32>
    %228 = arith.addf %226, %227 : vector<8x32xf32>
    %229 = arith.negf %228 : vector<8x32xf32>
    %230 = math.exp %229 : vector<8x32xf32>
    %cst_65 = arith.constant 1.000000e+00 : f32
    %231 = vector.broadcast %cst_65 : f32 to vector<8x32xf32>
    %232 = arith.addf %231, %230 : vector<8x32xf32>
    %233 = arith.divf %231, %232 : vector<8x32xf32>
    %234 = vector.extract_strided_slice %224 {offsets = [0, 32], sizes = [8, 32], strides = [1, 1]} : vector<8x96xf32> to vector<8x32xf32>
    %235 = vector.extract_strided_slice %225 {offsets = [0, 32], sizes = [8, 32], strides = [1, 1]} : vector<8x96xf32> to vector<8x32xf32>
    %236 = arith.addf %234, %235 : vector<8x32xf32>
    %237 = arith.negf %236 : vector<8x32xf32>
    %238 = math.exp %237 : vector<8x32xf32>
    %cst_66 = arith.constant 1.000000e+00 : f32
    %239 = vector.broadcast %cst_66 : f32 to vector<8x32xf32>
    %240 = arith.addf %239, %238 : vector<8x32xf32>
    %241 = arith.divf %239, %240 : vector<8x32xf32>
    %242 = vector.extract_strided_slice %224 {offsets = [0, 64], sizes = [8, 32], strides = [1, 1]} : vector<8x96xf32> to vector<8x32xf32>
    %243 = vector.extract_strided_slice %225 {offsets = [0, 64], sizes = [8, 32], strides = [1, 1]} : vector<8x96xf32> to vector<8x32xf32>
    %244 = arith.addf %243, %8 : vector<8x32xf32>
    %245 = arith.mulf %233, %244 : vector<8x32xf32>
    %246 = arith.addf %242, %245 : vector<8x32xf32>
    %247 = math.tanh %246 : vector<8x32xf32>
    %cst_67 = arith.constant 1.000000e+00 : f32
    %248 = vector.broadcast %cst_67 : f32 to vector<8x32xf32>
    %249 = arith.subf %248, %241 : vector<8x32xf32>
    %250 = arith.mulf %249, %247 : vector<8x32xf32>
    %251 = arith.mulf %241, %217 : vector<8x32xf32>
    %252 = arith.addf %250, %251 : vector<8x32xf32>
    %253 = arith.index_cast %c6_i32 : i32 to index
    %c0_68 = arith.constant 0 : index
    %c0_69 = arith.constant 0 : index
    %254 = vector.load %arg8[%253, %c0_68, %c0_69] : memref<8x8x32xf32, #tpu.memory_space<vmem>>, vector<1x8x32xf32>
    %255 = vector.shape_cast %254 : vector<1x8x32xf32> to vector<8x32xf32>
    %256 = vector.shape_cast %252 : vector<8x32xf32> to vector<1x8x32xf32>
    tpu.vector_store %arg8[%253, %c0_68, %c0_69], %256 {strides = array<i32>} : memref<8x8x32xf32, #tpu.memory_space<vmem>>, vector<1x8x32xf32>,
    %c7_i32 = arith.constant 7 : i32
    %257 = arith.index_cast %c7_i32 : i32 to index
    %c0_70 = arith.constant 0 : index
    %c0_71 = arith.constant 0 : index
    %258 = vector.load %arg7[%257, %c0_70, %c0_71] : memref<8x8x96xf32, #tpu.memory_space<vmem>>, vector<1x8x96xf32>
    %259 = vector.shape_cast %258 : vector<1x8x96xf32> to vector<8x96xf32>
    %cst_72 = arith.constant dense<0.000000e+00> : vector<8x96xf32>
    %260 = tpu.matmul %252, %5, %cst_72 {dimension_numbers = #tpu.dot_dimension_numbers<[1], [0], [0], [1], [0, 0, 1, 1], [], []>} : vector<8x32xf32>, vector<32x96xf32>, vector<8x96xf32> -> vector<8x96xf32>
    %261 = vector.extract_strided_slice %259 {offsets = [0, 0], sizes = [8, 32], strides = [1, 1]} : vector<8x96xf32> to vector<8x32xf32>
    %262 = vector.extract_strided_slice %260 {offsets = [0, 0], sizes = [8, 32], strides = [1, 1]} : vector<8x96xf32> to vector<8x32xf32>
    %263 = arith.addf %261, %262 : vector<8x32xf32>
    %264 = arith.negf %263 : vector<8x32xf32>
    %265 = math.exp %264 : vector<8x32xf32>
    %cst_73 = arith.constant 1.000000e+00 : f32
    %266 = vector.broadcast %cst_73 : f32 to vector<8x32xf32>
    %267 = arith.addf %266, %265 : vector<8x32xf32>
    %268 = arith.divf %266, %267 : vector<8x32xf32>
    %269 = vector.extract_strided_slice %259 {offsets = [0, 32], sizes = [8, 32], strides = [1, 1]} : vector<8x96xf32> to vector<8x32xf32>
    %270 = vector.extract_strided_slice %260 {offsets = [0, 32], sizes = [8, 32], strides = [1, 1]} : vector<8x96xf32> to vector<8x32xf32>
    %271 = arith.addf %269, %270 : vector<8x32xf32>
    %272 = arith.negf %271 : vector<8x32xf32>
    %273 = math.exp %272 : vector<8x32xf32>
    %cst_74 = arith.constant 1.000000e+00 : f32
    %274 = vector.broadcast %cst_74 : f32 to vector<8x32xf32>
    %275 = arith.addf %274, %273 : vector<8x32xf32>
    %276 = arith.divf %274, %275 : vector<8x32xf32>
    %277 = vector.extract_strided_slice %259 {offsets = [0, 64], sizes = [8, 32], strides = [1, 1]} : vector<8x96xf32> to vector<8x32xf32>
    %278 = vector.extract_strided_slice %260 {offsets = [0, 64], sizes = [8, 32], strides = [1, 1]} : vector<8x96xf32> to vector<8x32xf32>
    %279 = arith.addf %278, %8 : vector<8x32xf32>
    %280 = arith.mulf %268, %279 : vector<8x32xf32>
    %281 = arith.addf %277, %280 : vector<8x32xf32>
    %282 = math.tanh %281 : vector<8x32xf32>
    %cst_75 = arith.constant 1.000000e+00 : f32
    %283 = vector.broadcast %cst_75 : f32 to vector<8x32xf32>
    %284 = arith.subf %283, %276 : vector<8x32xf32>
    %285 = arith.mulf %284, %282 : vector<8x32xf32>
    %286 = arith.mulf %276, %252 : vector<8x32xf32>
    %287 = arith.addf %285, %286 : vector<8x32xf32>
    %288 = arith.index_cast %c7_i32 : i32 to index
    %c0_76 = arith.constant 0 : index
    %c0_77 = arith.constant 0 : index
    %289 = vector.load %arg8[%288, %c0_76, %c0_77] : memref<8x8x32xf32, #tpu.memory_space<vmem>>, vector<1x8x32xf32>
    %290 = vector.shape_cast %289 : vector<1x8x32xf32> to vector<8x32xf32>
    %291 = vector.shape_cast %287 : vector<8x32xf32> to vector<1x8x32xf32>
    tpu.vector_store %arg8[%288, %c0_76, %c0_77], %291 {strides = array<i32>} : memref<8x8x32xf32, #tpu.memory_space<vmem>>, vector<1x8x32xf32>,
    %c8_i32 = arith.constant 8 : i32
    %c0_78 = arith.constant 0 : index
    %c0_79 = arith.constant 0 : index
    %c0_80 = arith.constant 0 : index
    %292 = vector.load %arg8[%c0_78, %c0_79, %c0_80] : memref<8x8x32xf32, #tpu.memory_space<vmem>>, vector<8x8x32xf32>
    %293 = vector.shape_cast %9 : vector<1x32xf32> to vector<1x1x32xf32>
    %294 = vector.broadcast %293 : vector<1x1x32xf32> to vector<8x8x32xf32>
    %295 = arith.mulf %292, %294 : vector<8x8x32xf32>
    %cst_81 = arith.constant dense<0.000000e+00> : vector<8x8xf32>
    %296 = vector.multi_reduction <add>, %295, %cst_81 [2] : vector<8x8x32xf32> to vector<8x8xf32>
    %297 = vector.broadcast %10 : vector<1x1xf32> to vector<8x8xf32>
    %298 = arith.addf %296, %297 : vector<8x8xf32>
    %299 = arith.negf %298 : vector<8x8xf32>
    %300 = math.exp %299 : vector<8x8xf32>
    %cst_82 = arith.constant 1.000000e+00 : f32
    %301 = vector.broadcast %cst_82 : f32 to vector<8x8xf32>
    %302 = arith.addf %301, %300 : vector<8x8xf32>
    %303 = arith.divf %301, %302 : vector<8x8xf32>
    %c0_83 = arith.constant 0 : index
    %c0_84 = arith.constant 0 : index
    %304 = vector.load %arg6[%c0_83, %c0_84] : memref<8x8xf32, #tpu.memory_space<vmem>>, vector<8x8xf32>
    tpu.vector_store %arg6[%c0_83, %c0_84], %303 {strides = array<i32>} : memref<8x8xf32, #tpu.memory_space<vmem>>, vector<8x8xf32>,
    return
  }
  func.func @transform_0(%arg0: i32) -> (i32, i32) {
    %c0_i32 = arith.constant 0 : i32
    %c0_i32_0 = arith.constant 0 : i32
    %c0_i32_1 = arith.constant 0 : i32
    return %c0_i32, %c0_i32_0 : i32, i32
  }
  func.func @transform_1(%arg0: i32) -> (i32, i32) {
    %c0_i32 = arith.constant 0 : i32
    %c0_i32_0 = arith.constant 0 : i32
    %c0_i32_1 = arith.constant 0 : i32
    return %c0_i32, %c0_i32_0 : i32, i32
  }
  func.func @transform_2(%arg0: i32) -> (i32, i32) {
    %c0_i32 = arith.constant 0 : i32
    %c0_i32_0 = arith.constant 0 : i32
    %c0_i32_1 = arith.constant 0 : i32
    return %c0_i32, %c0_i32_0 : i32, i32
  }
  func.func @transform_3(%arg0: i32) -> (i32, i32) {
    %c0_i32 = arith.constant 0 : i32
    %c0_i32_0 = arith.constant 0 : i32
    %c0_i32_1 = arith.constant 0 : i32
    return %c0_i32, %c0_i32_0 : i32, i32
  }
  func.func @transform_4(%arg0: i32) -> (i32, i32) {
    %c0_i32 = arith.constant 0 : i32
    %c0_i32_0 = arith.constant 0 : i32
    %c0_i32_1 = arith.constant 0 : i32
    return %c0_i32, %c0_i32_0 : i32, i32
  }
  func.func @transform_5(%arg0: i32) -> (i32, i32) {
    %c0_i32 = arith.constant 0 : i32
    %c0_i32_0 = arith.constant 0 : i32
    %c0_i32_1 = arith.constant 0 : i32
    return %c0_i32, %c0_i32_0 : i32, i32
  }
}

</mosaic_0001>

<llo_original>
// kernel: tpu_custom_call.1
$region0: #{tpu_custom_call.1}
  #allocation0 [shape = 'u32[]', space=smem, size = 0x4, offset = 0x4, fixed_abs, tag = 'smem constant byte address 0x4 - core index']
  #allocation1 [shape = 'u32[72,128]{1,0:T(1,128)}', space=vmem, size = 0x9000, scoped, tag = 'internal scratch']
  #allocation2 [shape = 'f32[8,8,96]{2,1,0:T(8,128)}', space=vmem, size = 0x8000, scoped, tag = 'scratch operand']
  #allocation3 [shape = 'f32[8,8,32]{2,1,0:T(8,128)}', space=vmem, size = 0x8000, scoped, tag = 'scratch operand']
  %s0 = inlined_call_operand.vmem [shape: f32[64,3], index: 0, kind: input, shape index: {}]
  %s1 = inlined_call_operand.vmem [shape: f32[8,32], index: 1, kind: input, shape index: {}]
  %s2 = inlined_call_operand.vmem [shape: f32[3,96], index: 2, kind: input, shape index: {}]
  %s3 = inlined_call_operand.vmem [shape: f32[32,96], index: 3, kind: input, shape index: {}]
  %s4 = inlined_call_operand.vmem [shape: f32[3,32], index: 4, kind: input, shape index: {}]
  %s5 = inlined_call_operand.hbm [shape: f32[8,8], index: 5, kind: output, shape index: {}]
  %s6 = sld [smem:[#allocation0]]
  $region30: #{tpu_custom_call.1} parent=0
    _
  %s8 = ssub.s32 1, %s6
  %s9 = scalar_select 0, %s8, %s6
  $region1: #{tpu_custom_call.1} parent=0
    #allocation4 [shape = 'u8[4096]{0}', space=vmem, size = 0x1000, scoped, tag = 'output window, operand 0, single buffered']
    #allocation5 [shape = 's32[1]{0}', space=sflag, size = 0x4, scoped, tag = 'scoped memory for tpu_custom_call.1']
    %10 = vsyncpa [#allocation5], 0
    // Predicated region
    $region2: #{tpu_custom_call.1} parent=1 // pred_check
      _
    $region3: #{tpu_custom_call.1} parent=1 // pred_check_branch
      %12 = sbr.rel (0) target = $region5
    $region4: #{tpu_custom_call.1} parent=1 // pred_region
      _
    $region5: #{tpu_custom_call.1} parent=1 // pred_fallthru
      _
    // Predicated region
    $region6: #{tpu_custom_call.1} parent=1 // pred_check
      _
    $region7: #{tpu_custom_call.1} parent=1 // pred_check_branch
      %14 = sbr.rel (0) target = $region9
    $region8: #{tpu_custom_call.1} parent=1 // pred_region
      _
    $region9: #{tpu_custom_call.1} parent=1 // pred_fallthru
      _
    // Predicated region
    $region10: #{tpu_custom_call.1} parent=1 // pred_check
      _
    $region11: #{tpu_custom_call.1} parent=1 // pred_check_branch
      %16 = sbr.rel (0) target = $region13
    $region12: #{tpu_custom_call.1} parent=1 // pred_region
      _
    $region13: #{tpu_custom_call.1} parent=1 // pred_fallthru
      _
    // Predicated region
    $region14: #{tpu_custom_call.1} parent=1 // pred_check
      _
    $region15: #{tpu_custom_call.1} parent=1 // pred_check_branch
      %18 = sbr.rel (0) target = $region17
    $region16: #{tpu_custom_call.1} parent=1 // pred_region
      _
    $region17: #{tpu_custom_call.1} parent=1 // pred_fallthru
      _
    // Predicated region
    $region18: #{tpu_custom_call.1} parent=1 // pred_check
      _
    $region19: #{tpu_custom_call.1} parent=1 // pred_check_branch
      %20 = sbr.rel (0) target = $region21
    $region20: #{tpu_custom_call.1} parent=1 // pred_region
      _
    $region21: #{tpu_custom_call.1} parent=1 // pred_fallthru
      _
    %v21 = vld [vmem:[%s0] sm:$0xff]
    %v22 = vld [vmem:[%s0 + $0x8] sm:$0xff]
    %v23 = vld [vmem:[%s0 + $0x10] sm:$0xff]
    %v24 = vld [vmem:[%s0 + $0x18] sm:$0xff]
    %v25 = vld [vmem:[%s0 + $0x20] sm:$0xff]
    %v26 = vld [vmem:[%s0 + $0x28] sm:$0xff]
    %v27 = vld [vmem:[%s0 + $0x30] sm:$0xff]
    %v28 = vld [vmem:[%s0 + $0x38] sm:$0xff]
    %v29 = vld [vmem:[%s2] sm:$0x7]
    %vm30 = vcmask 23552
    %v32 = vsel %vm30, %v21, 0
    %v35 = vsel %vm30, %v22, 0
    %v38 = vsel %vm30, %v23, 0
    %v41 = vsel %vm30, %v24, 0
    %v44 = vsel %vm30, %v25, 0
    %v47 = vsel %vm30, %v26, 0
    %v50 = vsel %vm30, %v27, 0
    %v53 = vsel %vm30, %v28, 0
    %vm55 = vcmask 1042432
    %v57 = vsel %vm55, %v29, 0
    %59 = vmatpush.msra.mxu0 0.0
    %60 = vmatpush.msra.mxu0 0.0
    %61 = vmatpush.msra.mxu0 0.0
    %62 = vmatpush.msra.mxu0 0.0
    %63 = vmatpush.msra.mxu0 0.0
    %64 = vmatpush.msra.mxu0 0.0
    %65 = vmatpush.msra.mxu0 0.0
    %66 = vmatpush.msra.mxu0 0.0
    %67 = vmatpush.msra.mxu0 0.0
    %68 = vmatpush.msra.mxu0 0.0
    %69 = vmatpush.msra.mxu0 0.0
    %70 = vmatpush.msra.mxu0 0.0
    %71 = vmatpush.msra.mxu0 0.0
    %72 = vmatpush.msra.mxu0 0.0
    %73 = vmatpush.msra.mxu0 0.0
    %74 = vmatpush.msra.mxu0 %v57
    %75 = vmatmul.f32.gmra.mxu0 %v32
    %v76 = vpop.f32.mrf.mxu0
    %v77 = vadd.f32 0.0, %v76
    %78 = vmatmul.f32.gmra.mxu0 %v35
    %v79 = vpop.f32.mrf.mxu0
    %v80 = vadd.f32 0.0, %v79
    %81 = vmatmul.f32.gmra.mxu0 %v38
    %v82 = vpop.f32.mrf.mxu0
    %v83 = vadd.f32 0.0, %v82
    %84 = vmatmul.f32.gmra.mxu0 %v41
    %v85 = vpop.f32.mrf.mxu0
    %v86 = vadd.f32 0.0, %v85
    %87 = vmatmul.f32.gmra.mxu0 %v44
    %v88 = vpop.f32.mrf.mxu0
    %v89 = vadd.f32 0.0, %v88
    %90 = vmatmul.f32.gmra.mxu0 %v47
    %v91 = vpop.f32.mrf.mxu0
    %v92 = vadd.f32 0.0, %v91
    %93 = vmatmul.f32.gmra.mxu0 %v50
    %v94 = vpop.f32.mrf.mxu0
    %v95 = vadd.f32 0.0, %v94
    %96 = vmatmul.f32.gmra.mxu0 %v53
    %v97 = vpop.f32.mrf.mxu0
    %v98 = vadd.f32 0.0, %v97
    %99 = vdwg.mxu0
    %vm100 = vcmask 785408
    %101 = vst.msk [vmem:[#allocation2] sm:$0xff] %vm100, %v77
    %102 = vst.msk [vmem:[#allocation2 + $0x8] sm:$0xff] %vm100, %v80
    %103 = vst.msk [vmem:[#allocation2 + $0x10] sm:$0xff] %vm100, %v83
    %104 = vst.msk [vmem:[#allocation2 + $0x18] sm:$0xff] %vm100, %v86
    %105 = vst.msk [vmem:[#allocation2 + $0x20] sm:$0xff] %vm100, %v89
    %106 = vst.msk [vmem:[#allocation2 + $0x28] sm:$0xff] %vm100, %v92
    %107 = vst.msk [vmem:[#allocation2 + $0x30] sm:$0xff] %vm100, %v95
    %108 = vst.msk [vmem:[#allocation2 + $0x38] sm:$0xff] %vm100, %v98
    %v109 = vld [vmem:[%s3] sm:$0xff]
    %v110 = vld [vmem:[%s3 + $0x8] sm:$0xff]
    %v111 = vld [vmem:[%s3 + $0x10] sm:$0xff]
    %v112 = vld [vmem:[%s3 + $0x18] sm:$0xff]
    %v113 = vld [vmem:[%s4] sm:$0x1]
    %v114 = vperm.slane %v113, 0
    %v115 = vld [vmem:[%s4 + $0x1] sm:$0x1]
    %v116 = vld [vmem:[%s4 + $0x2] sm:$0x1]
    %v117 = vld [vmem:[%s1] sm:$0xff]
    %v118 = vld [vmem:[#allocation2] sm:$0xff]
    %vm119 = vcmask 261120
    %v121 = vsel %vm119, %v117, 0
    %123 = vmatpush.msra.mxu0 0.0
    %124 = vmatpush.msra.mxu0 0.0
    %125 = vmatpush.msra.mxu0 0.0
    %126 = vmatpush.msra.mxu0 0.0
    %127 = vmatpush.msra.mxu0 0.0
    %128 = vmatpush.msra.mxu0 0.0
    %129 = vmatpush.msra.mxu0 0.0
    %130 = vmatpush.msra.mxu0 0.0
    %131 = vmatpush.msra.mxu0 0.0
    %132 = vmatpush.msra.mxu0 0.0
    %133 = vmatpush.msra.mxu0 0.0
    %134 = vmatpush.msra.mxu0 0.0
    %135 = vmatpush.msra.mxu0 %v112
    %136 = vmatpush.msra.mxu0 %v111
    %137 = vmatpush.msra.mxu0 %v110
    %138 = vmatpush.msra.mxu0 %v109
    %139 = vmatmul.f32.gmra.mxu0 %v121
    %v140 = vpop.f32.mrf.mxu0
    %v141 = vadd.f32 0.0, %v140
    %142 = vdwg.mxu0
    %v143 = vadd.f32 %v118, %v141
    %v144 = vxor.u32 %v143, 2147483648
    %v145 = vmul.f32 %v144, 1.442695
    %v146 = vpow.pop %v145
    %v147 = vadd.f32 %v146, 1.0
    %v148 = vrcp.pop %v147
    %v149 = vmul.f32 %v147, %v148
    %v150 = vsub.f32 1.0, %v149
    %v151 = vmul.f32 %v148, %v150
    %v152 = vadd.f32 %v148, %v151
    %vm153 = vweird.f32 %v147
    %vm154 = vweird.f32 %v148
    %vm155 = vmor %vm153, %vm154
    %v156 = vsel %vm155, %v148, %v152
    %v157 = vand.u32 2147483647, %v147
    %vm158 = vcmp.eq.f32.partialorder %v157, 8.507059e+37
    %v159 = vand.u32 %v147, 2147483648
    %v160 = vor.u32 1.1754944e-38, %v159
    %v161 = vsel %vm158, %v160, %v156
    %v162 = vmul.f32 1.0, %v161
    %164 = vrot.lane.b32.xlu0 %v114, 64
    %v165 = vpop.permute.xlu0 %164
    %v167 = vadd.f32 %v141, %v165
    %169 = vrot.lane.b32.xlu0 %v167, 64
    %v170 = vpop.permute.xlu0 %169
    %v172 = vmul.f32 %v162, %v170
    %174 = vrot.lane.b32.xlu0 %v172, 64
    %v175 = vpop.permute.xlu0 %174
    %v177 = vadd.f32 %v118, %v175
    %v178 = vtanh.pop %v177
    %v179 = vsub.f32 1.0, %v162
    %181 = vrot.lane.b32.xlu0 %v178, 96
    %v182 = vpop.permute.xlu0 %181
    %v184 = vmul.f32 %v179, %v182
    %185 = vrot.lane.b32.xlu0 %v117, 32
    %v186 = vpop.permute.xlu0 %185
    %v188 = vmul.f32 %v162, %v186
    %v189 = vadd.f32 %v184, %v188
    %191 = vrot.lane.b32.xlu0 %v189, 96
    %v192 = vpop.permute.xlu0 %191
    %194 = vst.msk [vmem:[#allocation3] sm:$0xff] %vm119, %v192
    %s195 = scalar_lea.vmem [#allocation2], 8
    %v196 = vld [vmem:[%s195] sm:$0xff]
    %v197 = vsel %vm119, %v192, 0
    %199 = vmatpush.msra.mxu0 0.0
    %200 = vmatpush.msra.mxu0 0.0
    %201 = vmatpush.msra.mxu0 0.0
    %202 = vmatpush.msra.mxu0 0.0
    %203 = vmatpush.msra.mxu0 0.0
    %204 = vmatpush.msra.mxu0 0.0
    %205 = vmatpush.msra.mxu0 0.0
    %206 = vmatpush.msra.mxu0 0.0
    %207 = vmatpush.msra.mxu0 0.0
    %208 = vmatpush.msra.mxu0 0.0
    %209 = vmatpush.msra.mxu0 0.0
    %210 = vmatpush.msra.mxu0 0.0
    %211 = vmatpush.msra.mxu0 %v112
    %212 = vmatpush.msra.mxu0 %v111
    %213 = vmatpush.msra.mxu0 %v110
    %214 = vmatpush.msra.mxu0 %v109
    %215 = vmatmul.f32.gmra.mxu0 %v197
    %v216 = vpop.f32.mrf.mxu0
    %v217 = vadd.f32 0.0, %v216
    %218 = vdwg.mxu0
    %v219 = vadd.f32 %v196, %v217
    %v220 = vxor.u32 %v219, 2147483648
    %v221 = vmul.f32 %v220, 1.442695
    %v222 = vpow.pop %v221
    %v223 = vadd.f32 %v222, 1.0
    %v224 = vrcp.pop %v223
    %v225 = vmul.f32 %v223, %v224
    %v226 = vsub.f32 1.0, %v225
    %v227 = vmul.f32 %v224, %v226
    %v228 = vadd.f32 %v224, %v227
    %vm229 = vweird.f32 %v223
    %vm230 = vweird.f32 %v224
    %vm231 = vmor %vm229, %vm230
    %v232 = vsel %vm231, %v224, %v228
    %v233 = vand.u32 2147483647, %v223
    %vm234 = vcmp.eq.f32.partialorder %v233, 8.507059e+37
    %v235 = vand.u32 %v223, 2147483648
    %v236 = vor.u32 1.1754944e-38, %v235
    %v237 = vsel %vm234, %v236, %v232
    %v238 = vmul.f32 1.0, %v237
    %v239 = vadd.f32 %v217, %v165
    %241 = vrot.lane.b32.xlu0 %v239, 64
    %v242 = vpop.permute.xlu0 %241
    %v244 = vmul.f32 %v238, %v242
    %246 = vrot.lane.b32.xlu0 %v244, 64
    %v247 = vpop.permute.xlu0 %246
    %v249 = vadd.f32 %v196, %v247
    %v250 = vtanh.pop %v249
    %v251 = vsub.f32 1.0, %v238
    %253 = vrot.lane.b32.xlu0 %v250, 96
    %v254 = vpop.permute.xlu0 %253
    %v256 = vmul.f32 %v251, %v254
    %v257 = vmul.f32 %v238, %v189
    %v258 = vadd.f32 %v256, %v257
    %260 = vrot.lane.b32.xlu0 %v258, 96
    %v261 = vpop.permute.xlu0 %260
    %s263 = scalar_lea.vmem [#allocation3], 8
    %264 = vst.msk [vmem:[%s263] sm:$0xff] %vm119, %v261
    %s265 = scalar_lea.vmem [#allocation2], 16
    %v266 = vld [vmem:[%s265] sm:$0xff]
    %v267 = vsel %vm119, %v261, 0
    %269 = vmatpush.msra.mxu0 0.0
    %270 = vmatpush.msra.mxu0 0.0
    %271 = vmatpush.msra.mxu0 0.0
    %272 = vmatpush.msra.mxu0 0.0
    %273 = vmatpush.msra.mxu0 0.0
    %274 = vmatpush.msra.mxu0 0.0
    %275 = vmatpush.msra.mxu0 0.0
    %276 = vmatpush.msra.mxu0 0.0
    %277 = vmatpush.msra.mxu0 0.0
    %278 = vmatpush.msra.mxu0 0.0
    %279 = vmatpush.msra.mxu0 0.0
    %280 = vmatpush.msra.mxu0 0.0
    %281 = vmatpush.msra.mxu0 %v112
    %282 = vmatpush.msra.mxu0 %v111
    %283 = vmatpush.msra.mxu0 %v110
    %284 = vmatpush.msra.mxu0 %v109
    %285 = vmatmul.f32.gmra.mxu0 %v267
    %v286 = vpop.f32.mrf.mxu0
    %v287 = vadd.f32 0.0, %v286
    %288 = vdwg.mxu0
    %v289 = vadd.f32 %v266, %v287
    %v290 = vxor.u32 %v289, 2147483648
    %v291 = vmul.f32 %v290, 1.442695
    %v292 = vpow.pop %v291
    %v293 = vadd.f32 %v292, 1.0
    %v294 = vrcp.pop %v293
    %v295 = vmul.f32 %v293, %v294
    %v296 = vsub.f32 1.0, %v295
    %v297 = vmul.f32 %v294, %v296
    %v298 = vadd.f32 %v294, %v297
    %vm299 = vweird.f32 %v293
    %vm300 = vweird.f32 %v294
    %vm301 = vmor %vm299, %vm300
    %v302 = vsel %vm301, %v294, %v298
    %v303 = vand.u32 2147483647, %v293
    %vm304 = vcmp.eq.f32.partialorder %v303, 8.507059e+37
    %v305 = vand.u32 %v293, 2147483648
    %v306 = vor.u32 1.1754944e-38, %v305
    %v307 = vsel %vm304, %v306, %v302
    %v308 = vmul.f32 1.0, %v307
    %v309 = vadd.f32 %v287, %v165
    %311 = vrot.lane.b32.xlu0 %v309, 64
    %v312 = vpop.permute.xlu0 %311
    %v314 = vmul.f32 %v308, %v312
    %316 = vrot.lane.b32.xlu0 %v314, 64
    %v317 = vpop.permute.xlu0 %316
    %v319 = vadd.f32 %v266, %v317
    %v320 = vtanh.pop %v319
    %v321 = vsub.f32 1.0, %v308
    %323 = vrot.lane.b32.xlu0 %v320, 96
    %v324 = vpop.permute.xlu0 %323
    %v326 = vmul.f32 %v321, %v324
    %v327 = vmul.f32 %v308, %v258
    %v328 = vadd.f32 %v326, %v327
    %330 = vrot.lane.b32.xlu0 %v328, 96
    %v331 = vpop.permute.xlu0 %330
    %s333 = scalar_lea.vmem [#allocation3], 16
    %334 = vst.msk [vmem:[%s333] sm:$0xff] %vm119, %v331
    %s335 = scalar_lea.vmem [#allocation2], 24
    %v336 = vld [vmem:[%s335] sm:$0xff]
    %v337 = vsel %vm119, %v331, 0
    %339 = vmatpush.msra.mxu0 0.0
    %340 = vmatpush.msra.mxu0 0.0
    %341 = vmatpush.msra.mxu0 0.0
    %342 = vmatpush.msra.mxu0 0.0
    %343 = vmatpush.msra.mxu0 0.0
    %344 = vmatpush.msra.mxu0 0.0
    %345 = vmatpush.msra.mxu0 0.0
    %346 = vmatpush.msra.mxu0 0.0
    %347 = vmatpush.msra.mxu0 0.0
    %348 = vmatpush.msra.mxu0 0.0
    %349 = vmatpush.msra.mxu0 0.0
    %350 = vmatpush.msra.mxu0 0.0
    %351 = vmatpush.msra.mxu0 %v112
    %352 = vmatpush.msra.mxu0 %v111
    %353 = vmatpush.msra.mxu0 %v110
    %354 = vmatpush.msra.mxu0 %v109
    %355 = vmatmul.f32.gmra.mxu0 %v337
    %v356 = vpop.f32.mrf.mxu0
    %v357 = vadd.f32 0.0, %v356
    %358 = vdwg.mxu0
    %v359 = vadd.f32 %v336, %v357
    %v360 = vxor.u32 %v359, 2147483648
    %v361 = vmul.f32 %v360, 1.442695
    %v362 = vpow.pop %v361
    %v363 = vadd.f32 %v362, 1.0
    %v364 = vrcp.pop %v363
    %v365 = vmul.f32 %v363, %v364
    %v366 = vsub.f32 1.0, %v365
    %v367 = vmul.f32 %v364, %v366
    %v368 = vadd.f32 %v364, %v367
    %vm369 = vweird.f32 %v363
    %vm370 = vweird.f32 %v364
    %vm371 = vmor %vm369, %vm370
    %v372 = vsel %vm371, %v364, %v368
    %v373 = vand.u32 2147483647, %v363
    %vm374 = vcmp.eq.f32.partialorder %v373, 8.507059e+37
    %v375 = vand.u32 %v363, 2147483648
    %v376 = vor.u32 1.1754944e-38, %v375
    %v377 = vsel %vm374, %v376, %v372
    %v378 = vmul.f32 1.0, %v377
    %v379 = vadd.f32 %v357, %v165
    %381 = vrot.lane.b32.xlu0 %v379, 64
    %v382 = vpop.permute.xlu0 %381
    %v384 = vmul.f32 %v378, %v382
    %386 = vrot.lane.b32.xlu0 %v384, 64
    %v387 = vpop.permute.xlu0 %386
    %v389 = vadd.f32 %v336, %v387
    %v390 = vtanh.pop %v389
    %v391 = vsub.f32 1.0, %v378
    %393 = vrot.lane.b32.xlu0 %v390, 96
    %v394 = vpop.permute.xlu0 %393
    %v396 = vmul.f32 %v391, %v394
    %v397 = vmul.f32 %v378, %v328
    %v398 = vadd.f32 %v396, %v397
    %400 = vrot.lane.b32.xlu0 %v398, 96
    %v401 = vpop.permute.xlu0 %400
    %s403 = scalar_lea.vmem [#allocation3], 24
    %404 = vst.msk [vmem:[%s403] sm:$0xff] %vm119, %v401
    %s405 = scalar_lea.vmem [#allocation2], 32
    %v406 = vld [vmem:[%s405] sm:$0xff]
    %v407 = vsel %vm119, %v401, 0
    %409 = vmatpush.msra.mxu0 0.0
    %410 = vmatpush.msra.mxu0 0.0
    %411 = vmatpush.msra.mxu0 0.0
    %412 = vmatpush.msra.mxu0 0.0
    %413 = vmatpush.msra.mxu0 0.0
    %414 = vmatpush.msra.mxu0 0.0
    %415 = vmatpush.msra.mxu0 0.0
    %416 = vmatpush.msra.mxu0 0.0
    %417 = vmatpush.msra.mxu0 0.0
    %418 = vmatpush.msra.mxu0 0.0
    %419 = vmatpush.msra.mxu0 0.0
    %420 = vmatpush.msra.mxu0 0.0
    %421 = vmatpush.msra.mxu0 %v112
    %422 = vmatpush.msra.mxu0 %v111
    %423 = vmatpush.msra.mxu0 %v110
    %424 = vmatpush.msra.mxu0 %v109
    %425 = vmatmul.f32.gmra.mxu0 %v407
    %v426 = vpop.f32.mrf.mxu0
    %v427 = vadd.f32 0.0, %v426
    %428 = vdwg.mxu0
    %v429 = vadd.f32 %v406, %v427
    %v430 = vxor.u32 %v429, 2147483648
    %v431 = vmul.f32 %v430, 1.442695
    %v432 = vpow.pop %v431
    %v433 = vadd.f32 %v432, 1.0
    %v434 = vrcp.pop %v433
    %v435 = vmul.f32 %v433, %v434
    %v436 = vsub.f32 1.0, %v435
    %v437 = vmul.f32 %v434, %v436
    %v438 = vadd.f32 %v434, %v437
    %vm439 = vweird.f32 %v433
    %vm440 = vweird.f32 %v434
    %vm441 = vmor %vm439, %vm440
    %v442 = vsel %vm441, %v434, %v438
    %v443 = vand.u32 2147483647, %v433
    %vm444 = vcmp.eq.f32.partialorder %v443, 8.507059e+37
    %v445 = vand.u32 %v433, 2147483648
    %v446 = vor.u32 1.1754944e-38, %v445
    %v447 = vsel %vm444, %v446, %v442
    %v448 = vmul.f32 1.0, %v447
    %v449 = vadd.f32 %v427, %v165
    %451 = vrot.lane.b32.xlu0 %v449, 64
    %v452 = vpop.permute.xlu0 %451
    %v454 = vmul.f32 %v448, %v452
    %456 = vrot.lane.b32.xlu0 %v454, 64
    %v457 = vpop.permute.xlu0 %456
    %v459 = vadd.f32 %v406, %v457
    %v460 = vtanh.pop %v459
    %v461 = vsub.f32 1.0, %v448
    %463 = vrot.lane.b32.xlu0 %v460, 96
    %v464 = vpop.permute.xlu0 %463
    %v466 = vmul.f32 %v461, %v464
    %v467 = vmul.f32 %v448, %v398
    %v468 = vadd.f32 %v466, %v467
    %470 = vrot.lane.b32.xlu0 %v468, 96
    %v471 = vpop.permute.xlu0 %470
    %s473 = scalar_lea.vmem [#allocation3], 32
    %474 = vst.msk [vmem:[%s473] sm:$0xff] %vm119, %v471
    %s475 = scalar_lea.vmem [#allocation2], 40
    %v476 = vld [vmem:[%s475] sm:$0xff]
    %v477 = vsel %vm119, %v471, 0
    %479 = vmatpush.msra.mxu0 0.0
    %480 = vmatpush.msra.mxu0 0.0
    %481 = vmatpush.msra.mxu0 0.0
    %482 = vmatpush.msra.mxu0 0.0
    %483 = vmatpush.msra.mxu0 0.0
    %484 = vmatpush.msra.mxu0 0.0
    %485 = vmatpush.msra.mxu0 0.0
    %486 = vmatpush.msra.mxu0 0.0
    %487 = vmatpush.msra.mxu0 0.0
    %488 = vmatpush.msra.mxu0 0.0
    %489 = vmatpush.msra.mxu0 0.0
    %490 = vmatpush.msra.mxu0 0.0
    %491 = vmatpush.msra.mxu0 %v112
    %492 = vmatpush.msra.mxu0 %v111
    %493 = vmatpush.msra.mxu0 %v110
    %494 = vmatpush.msra.mxu0 %v109
    %495 = vmatmul.f32.gmra.mxu0 %v477
    %v496 = vpop.f32.mrf.mxu0
    %v497 = vadd.f32 0.0, %v496
    %498 = vdwg.mxu0
    %v499 = vadd.f32 %v476, %v497
    %v500 = vxor.u32 %v499, 2147483648
    %v501 = vmul.f32 %v500, 1.442695
    %v502 = vpow.pop %v501
    %v503 = vadd.f32 %v502, 1.0
    %v504 = vrcp.pop %v503
    %v505 = vmul.f32 %v503, %v504
    %v506 = vsub.f32 1.0, %v505
    %v507 = vmul.f32 %v504, %v506
    %v508 = vadd.f32 %v504, %v507
    %vm509 = vweird.f32 %v503
    %vm510 = vweird.f32 %v504
    %vm511 = vmor %vm509, %vm510
    %v512 = vsel %vm511, %v504, %v508
    %v513 = vand.u32 2147483647, %v503
    %vm514 = vcmp.eq.f32.partialorder %v513, 8.507059e+37
    %v515 = vand.u32 %v503, 2147483648
    %v516 = vor.u32 1.1754944e-38, %v515
    %v517 = vsel %vm514, %v516, %v512
    %v518 = vmul.f32 1.0, %v517
    %v519 = vadd.f32 %v497, %v165
    %521 = vrot.lane.b32.xlu0 %v519, 64
    %v522 = vpop.permute.xlu0 %521
    %v524 = vmul.f32 %v518, %v522
    %526 = vrot.lane.b32.xlu0 %v524, 64
    %v527 = vpop.permute.xlu0 %526
    %v529 = vadd.f32 %v476, %v527
    %v530 = vtanh.pop %v529
    %v531 = vsub.f32 1.0, %v518
    %533 = vrot.lane.b32.xlu0 %v530, 96
    %v534 = vpop.permute.xlu0 %533
    %v536 = vmul.f32 %v531, %v534
    %v537 = vmul.f32 %v518, %v468
    %v538 = vadd.f32 %v536, %v537
    %540 = vrot.lane.b32.xlu0 %v538, 96
    %v541 = vpop.permute.xlu0 %540
    %s543 = scalar_lea.vmem [#allocation3], 40
    %544 = vst.msk [vmem:[%s543] sm:$0xff] %vm119, %v541
    %s545 = scalar_lea.vmem [#allocation2], 48
    %v546 = vld [vmem:[%s545] sm:$0xff]
    %v547 = vsel %vm119, %v541, 0
    %549 = vmatpush.msra.mxu0 0.0
    %550 = vmatpush.msra.mxu0 0.0
    %551 = vmatpush.msra.mxu0 0.0
    %552 = vmatpush.msra.mxu0 0.0
    %553 = vmatpush.msra.mxu0 0.0
    %554 = vmatpush.msra.mxu0 0.0
    %555 = vmatpush.msra.mxu0 0.0
    %556 = vmatpush.msra.mxu0 0.0
    %557 = vmatpush.msra.mxu0 0.0
    %558 = vmatpush.msra.mxu0 0.0
    %559 = vmatpush.msra.mxu0 0.0
    %560 = vmatpush.msra.mxu0 0.0
    %561 = vmatpush.msra.mxu0 %v112
    %562 = vmatpush.msra.mxu0 %v111
    %563 = vmatpush.msra.mxu0 %v110
    %564 = vmatpush.msra.mxu0 %v109
    %565 = vmatmul.f32.gmra.mxu0 %v547
    %v566 = vpop.f32.mrf.mxu0
    %v567 = vadd.f32 0.0, %v566
    %568 = vdwg.mxu0
    %v569 = vadd.f32 %v546, %v567
    %v570 = vxor.u32 %v569, 2147483648
    %v571 = vmul.f32 %v570, 1.442695
    %v572 = vpow.pop %v571
    %v573 = vadd.f32 %v572, 1.0
    %v574 = vrcp.pop %v573
    %v575 = vmul.f32 %v573, %v574
    %v576 = vsub.f32 1.0, %v575
    %v577 = vmul.f32 %v574, %v576
    %v578 = vadd.f32 %v574, %v577
    %vm579 = vweird.f32 %v573
    %vm580 = vweird.f32 %v574
    %vm581 = vmor %vm579, %vm580
    %v582 = vsel %vm581, %v574, %v578
    %v583 = vand.u32 2147483647, %v573
    %vm584 = vcmp.eq.f32.partialorder %v583, 8.507059e+37
    %v585 = vand.u32 %v573, 2147483648
    %v586 = vor.u32 1.1754944e-38, %v585
    %v587 = vsel %vm584, %v586, %v582
    %v588 = vmul.f32 1.0, %v587
    %v589 = vadd.f32 %v567, %v165
    %591 = vrot.lane.b32.xlu0 %v589, 64
    %v592 = vpop.permute.xlu0 %591
    %v594 = vmul.f32 %v588, %v592
    %596 = vrot.lane.b32.xlu0 %v594, 64
    %v597 = vpop.permute.xlu0 %596
    %v599 = vadd.f32 %v546, %v597
    %v600 = vtanh.pop %v599
    %v601 = vsub.f32 1.0, %v588
    %603 = vrot.lane.b32.xlu0 %v600, 96
    %v604 = vpop.permute.xlu0 %603
    %v606 = vmul.f32 %v601, %v604
    %v607 = vmul.f32 %v588, %v538
    %v608 = vadd.f32 %v606, %v607
    %610 = vrot.lane.b32.xlu0 %v608, 96
    %v611 = vpop.permute.xlu0 %610
    %s613 = scalar_lea.vmem [#allocation3], 48
    %614 = vst.msk [vmem:[%s613] sm:$0xff] %vm119, %v611
    %s615 = scalar_lea.vmem [#allocation2], 56
    %v616 = vld [vmem:[%s615] sm:$0xff]
    %v617 = vsel %vm119, %v611, 0
    %619 = vmatpush.msra.mxu0 0.0
    %620 = vmatpush.msra.mxu0 0.0
    %621 = vmatpush.msra.mxu0 0.0
    %622 = vmatpush.msra.mxu0 0.0
    %623 = vmatpush.msra.mxu0 0.0
    %624 = vmatpush.msra.mxu0 0.0
    %625 = vmatpush.msra.mxu0 0.0
    %626 = vmatpush.msra.mxu0 0.0
    %627 = vmatpush.msra.mxu0 0.0
    %628 = vmatpush.msra.mxu0 0.0
    %629 = vmatpush.msra.mxu0 0.0
    %630 = vmatpush.msra.mxu0 0.0
    %631 = vmatpush.msra.mxu0 %v112
    %632 = vmatpush.msra.mxu0 %v111
    %633 = vmatpush.msra.mxu0 %v110
    %634 = vmatpush.msra.mxu0 %v109
    %635 = vmatmul.f32.gmra.mxu0 %v617
    %v636 = vpop.f32.mrf.mxu0
    %v637 = vadd.f32 0.0, %v636
    %638 = vdwg.mxu0
    %v639 = vadd.f32 %v616, %v637
    %v640 = vxor.u32 %v639, 2147483648
    %v641 = vmul.f32 %v640, 1.442695
    %v642 = vpow.pop %v641
    %v643 = vadd.f32 %v642, 1.0
    %v644 = vrcp.pop %v643
    %v645 = vmul.f32 %v643, %v644
    %v646 = vsub.f32 1.0, %v645
    %v647 = vmul.f32 %v644, %v646
    %v648 = vadd.f32 %v644, %v647
    %vm649 = vweird.f32 %v643
    %vm650 = vweird.f32 %v644
    %vm651 = vmor %vm649, %vm650
    %v652 = vsel %vm651, %v644, %v648
    %v653 = vand.u32 2147483647, %v643
    %vm654 = vcmp.eq.f32.partialorder %v653, 8.507059e+37
    %v655 = vand.u32 %v643, 2147483648
    %v656 = vor.u32 1.1754944e-38, %v655
    %v657 = vsel %vm654, %v656, %v652
    %v658 = vmul.f32 1.0, %v657
    %v659 = vadd.f32 %v637, %v165
    %661 = vrot.lane.b32.xlu0 %v659, 64
    %v662 = vpop.permute.xlu0 %661
    %v664 = vmul.f32 %v658, %v662
    %666 = vrot.lane.b32.xlu0 %v664, 64
    %v667 = vpop.permute.xlu0 %666
    %v669 = vadd.f32 %v616, %v667
    %v670 = vtanh.pop %v669
    %v671 = vsub.f32 1.0, %v658
    %673 = vrot.lane.b32.xlu0 %v670, 96
    %v674 = vpop.permute.xlu0 %673
    %v676 = vmul.f32 %v671, %v674
    %v677 = vmul.f32 %v658, %v608
    %v678 = vadd.f32 %v676, %v677
    %680 = vrot.lane.b32.xlu0 %v678, 96
    %v681 = vpop.permute.xlu0 %680
    %s683 = scalar_lea.vmem [#allocation3], 56
    %684 = vst.msk [vmem:[%s683] sm:$0xff] %vm119, %v681
    %v685 = vld [vmem:[#allocation3] sm:$0xff]
    %v686 = vld [vmem:[#allocation3 + $0x8] sm:$0xff]
    %v687 = vld [vmem:[#allocation3 + $0x10] sm:$0xff]
    %v688 = vld [vmem:[#allocation3 + $0x18] sm:$0xff]
    %v689 = vld [vmem:[#allocation3 + $0x20] sm:$0xff]
    %v690 = vld [vmem:[#allocation3 + $0x28] sm:$0xff]
    %v691 = vld [vmem:[#allocation3 + $0x30] sm:$0xff]
    %v692 = vld [vmem:[#allocation3 + $0x38] sm:$0xff]
    %v693 = vperm.slane %v115, 0
    %v694 = vmul.f32 %v685, %v693
    %v695 = vmul.f32 %v686, %v693
    %v696 = vmul.f32 %v687, %v693
    %v697 = vmul.f32 %v688, %v693
    %v698 = vmul.f32 %v689, %v693
    %v699 = vmul.f32 %v690, %v693
    %v700 = vmul.f32 %v691, %v693
    %v701 = vmul.f32 %v692, %v693
    %v702 = vsel %vm119, %v694, 0.0
    %703 = vadd.xlane.f32.xlu0 %v702
    %v704 = vpop.xlane.xlu0 %703
    %v705 = vsel %vm119, %v695, 0.0
    %706 = vadd.xlane.f32.xlu0 %v705
    %v707 = vpop.xlane.xlu0 %706
    %v708 = vsel %vm119, %v696, 0.0
    %709 = vadd.xlane.f32.xlu0 %v708
    %v710 = vpop.xlane.xlu0 %709
    %v711 = vsel %vm119, %v697, 0.0
    %712 = vadd.xlane.f32.xlu0 %v711
    %v713 = vpop.xlane.xlu0 %712
    %v714 = vsel %vm119, %v698, 0.0
    %715 = vadd.xlane.f32.xlu0 %v714
    %v716 = vpop.xlane.xlu0 %715
    %v717 = vsel %vm119, %v699, 0.0
    %718 = vadd.xlane.f32.xlu0 %v717
    %v719 = vpop.xlane.xlu0 %718
    %v720 = vsel %vm119, %v700, 0.0
    %721 = vadd.xlane.f32.xlu0 %v720
    %v722 = vpop.xlane.xlu0 %721
    %v723 = vsel %vm119, %v701, 0.0
    %724 = vadd.xlane.f32.xlu0 %v723
    %v725 = vpop.xlane.xlu0 %724
    %s727 = vtos %v116
    %v728 = vstv %s727
    %v730 = vadd.f32 %v704, %v728
    %v731 = vadd.f32 %v707, %v728
    %v732 = vadd.f32 %v710, %v728
    %v733 = vadd.f32 %v713, %v728
    %v734 = vadd.f32 %v716, %v728
    %v735 = vadd.f32 %v719, %v728
    %v736 = vadd.f32 %v722, %v728
    %v737 = vadd.f32 %v725, %v728
    %v738 = vxor.u32 %v730, 2147483648
    %v739 = vxor.u32 %v731, 2147483648
    %v740 = vxor.u32 %v732, 2147483648
    %v741 = vxor.u32 %v733, 2147483648
    %v742 = vxor.u32 %v734, 2147483648
    %v743 = vxor.u32 %v735, 2147483648
    %v744 = vxor.u32 %v736, 2147483648
    %v745 = vxor.u32 %v737, 2147483648
    %v746 = vmul.f32 %v738, 1.442695
    %v747 = vpow.pop %v746
    %v748 = vmul.f32 %v739, 1.442695
    %v749 = vpow.pop %v748
    %v750 = vmul.f32 %v740, 1.442695
    %v751 = vpow.pop %v750
    %v752 = vmul.f32 %v741, 1.442695
    %v753 = vpow.pop %v752
    %v754 = vmul.f32 %v742, 1.442695
    %v755 = vpow.pop %v754
    %v756 = vmul.f32 %v743, 1.442695
    %v757 = vpow.pop %v756
    %v758 = vmul.f32 %v744, 1.442695
    %v759 = vpow.pop %v758
    %v760 = vmul.f32 %v745, 1.442695
    %v761 = vpow.pop %v760
    %v762 = vadd.f32 %v747, 1.0
    %v763 = vadd.f32 %v749, 1.0
    %v764 = vadd.f32 %v751, 1.0
    %v765 = vadd.f32 %v753, 1.0
    %v766 = vadd.f32 %v755, 1.0
    %v767 = vadd.f32 %v757, 1.0
    %v768 = vadd.f32 %v759, 1.0
    %v769 = vadd.f32 %v761, 1.0
    %v770 = vrcp.pop %v762
    %v771 = vmul.f32 %v762, %v770
    %v772 = vsub.f32 1.0, %v771
    %v773 = vmul.f32 %v770, %v772
    %v774 = vadd.f32 %v770, %v773
    %vm775 = vweird.f32 %v762
    %vm776 = vweird.f32 %v770
    %vm777 = vmor %vm775, %vm776
    %v778 = vsel %vm777, %v770, %v774
    %v779 = vand.u32 2147483647, %v762
    %vm780 = vcmp.eq.f32.partialorder %v779, 8.507059e+37
    %v781 = vand.u32 %v762, 2147483648
    %v782 = vor.u32 1.1754944e-38, %v781
    %v783 = vsel %vm780, %v782, %v778
    %v784 = vmul.f32 1.0, %v783
    %v785 = vrcp.pop %v763
    %v786 = vmul.f32 %v763, %v785
    %v787 = vsub.f32 1.0, %v786
    %v788 = vmul.f32 %v785, %v787
    %v789 = vadd.f32 %v785, %v788
    %vm790 = vweird.f32 %v763
    %vm791 = vweird.f32 %v785
    %vm792 = vmor %vm790, %vm791
    %v793 = vsel %vm792, %v785, %v789
    %v794 = vand.u32 2147483647, %v763
    %vm795 = vcmp.eq.f32.partialorder %v794, 8.507059e+37
    %v796 = vand.u32 %v763, 2147483648
    %v797 = vor.u32 1.1754944e-38, %v796
    %v798 = vsel %vm795, %v797, %v793
    %v799 = vmul.f32 1.0, %v798
    %v800 = vrcp.pop %v764
    %v801 = vmul.f32 %v764, %v800
    %v802 = vsub.f32 1.0, %v801
    %v803 = vmul.f32 %v800, %v802
    %v804 = vadd.f32 %v800, %v803
    %vm805 = vweird.f32 %v764
    %vm806 = vweird.f32 %v800
    %vm807 = vmor %vm805, %vm806
    %v808 = vsel %vm807, %v800, %v804
    %v809 = vand.u32 2147483647, %v764
    %vm810 = vcmp.eq.f32.partialorder %v809, 8.507059e+37
    %v811 = vand.u32 %v764, 2147483648
    %v812 = vor.u32 1.1754944e-38, %v811
    %v813 = vsel %vm810, %v812, %v808
    %v814 = vmul.f32 1.0, %v813
    %v815 = vrcp.pop %v765
    %v816 = vmul.f32 %v765, %v815
    %v817 = vsub.f32 1.0, %v816
    %v818 = vmul.f32 %v815, %v817
    %v819 = vadd.f32 %v815, %v818
    %vm820 = vweird.f32 %v765
    %vm821 = vweird.f32 %v815
    %vm822 = vmor %vm820, %vm821
    %v823 = vsel %vm822, %v815, %v819
    %v824 = vand.u32 2147483647, %v765
    %vm825 = vcmp.eq.f32.partialorder %v824, 8.507059e+37
    %v826 = vand.u32 %v765, 2147483648
    %v827 = vor.u32 1.1754944e-38, %v826
    %v828 = vsel %vm825, %v827, %v823
    %v829 = vmul.f32 1.0, %v828
    %v830 = vrcp.pop %v766
    %v831 = vmul.f32 %v766, %v830
    %v832 = vsub.f32 1.0, %v831
    %v833 = vmul.f32 %v830, %v832
    %v834 = vadd.f32 %v830, %v833
    %vm835 = vweird.f32 %v766
    %vm836 = vweird.f32 %v830
    %vm837 = vmor %vm835, %vm836
    %v838 = vsel %vm837, %v830, %v834
    %v839 = vand.u32 2147483647, %v766
    %vm840 = vcmp.eq.f32.partialorder %v839, 8.507059e+37
    %v841 = vand.u32 %v766, 2147483648
    %v842 = vor.u32 1.1754944e-38, %v841
    %v843 = vsel %vm840, %v842, %v838
    %v844 = vmul.f32 1.0, %v843
    %v845 = vrcp.pop %v767
    %v846 = vmul.f32 %v767, %v845
    %v847 = vsub.f32 1.0, %v846
    %v848 = vmul.f32 %v845, %v847
    %v849 = vadd.f32 %v845, %v848
    %vm850 = vweird.f32 %v767
    %vm851 = vweird.f32 %v845
    %vm852 = vmor %vm850, %vm851
    %v853 = vsel %vm852, %v845, %v849
    %v854 = vand.u32 2147483647, %v767
    %vm855 = vcmp.eq.f32.partialorder %v854, 8.507059e+37
    %v856 = vand.u32 %v767, 2147483648
    %v857 = vor.u32 1.1754944e-38, %v856
    %v858 = vsel %vm855, %v857, %v853
    %v859 = vmul.f32 1.0, %v858
    %v860 = vrcp.pop %v768
    %v861 = vmul.f32 %v768, %v860
    %v862 = vsub.f32 1.0, %v861
    %v863 = vmul.f32 %v860, %v862
    %v864 = vadd.f32 %v860, %v863
    %vm865 = vweird.f32 %v768
    %vm866 = vweird.f32 %v860
    %vm867 = vmor %vm865, %vm866
    %v868 = vsel %vm867, %v860, %v864
    %v869 = vand.u32 2147483647, %v768
    %vm870 = vcmp.eq.f32.partialorder %v869, 8.507059e+37
    %v871 = vand.u32 %v768, 2147483648
    %v872 = vor.u32 1.1754944e-38, %v871
    %v873 = vsel %vm870, %v872, %v868
    %v874 = vmul.f32 1.0, %v873
    %v875 = vrcp.pop %v769
    %v876 = vmul.f32 %v769, %v875
    %v877 = vsub.f32 1.0, %v876
    %v878 = vmul.f32 %v875, %v877
    %v879 = vadd.f32 %v875, %v878
    %vm880 = vweird.f32 %v769
    %vm881 = vweird.f32 %v875
    %vm882 = vmor %vm880, %vm881
    %v883 = vsel %vm882, %v875, %v879
    %v884 = vand.u32 2147483647, %v769
    %vm885 = vcmp.eq.f32.partialorder %v884, 8.507059e+37
    %v886 = vand.u32 %v769, 2147483648
    %v887 = vor.u32 1.1754944e-38, %v886
    %v888 = vsel %vm885, %v887, %v883
    %v889 = vmul.f32 1.0, %v888
    %v898 = vlaneseq
    %v899 = vand.u32 %v898, 127
    %v900 = vperm.slane %v784, %v899
    %v901 = vperm.slane %v799, %v899
    %v902 = vperm.slane %v814, %v899
    %v903 = vperm.slane %v829, %v899
    %v904 = vperm.slane %v844, %v899
    %v905 = vperm.slane %v859, %v899
    %v906 = vperm.slane %v874, %v899
    %v907 = vperm.slane %v889, %v899
    %vm908 = vcmask 1041409
    %v909 = vsel %vm908, %v901, %v900
    %vm910 = vcmask 1042434
    %v911 = vsel %vm910, %v902, %v909
    %vm912 = vcmask 1043459
    %v913 = vsel %vm912, %v903, %v911
    %vm914 = vcmask 1044484
    %v915 = vsel %vm914, %v904, %v913
    %vm916 = vcmask 1045509
    %v917 = vsel %vm916, %v905, %v915
    %vm918 = vcmask 1046534
    %v919 = vsel %vm918, %v906, %v917
    %vm920 = vcmask 1047559
    %v921 = vsel %vm920, %v907, %v919
    %vm923 = vcmask 64512
    %924 = vst.msk [vmem:[#allocation4] sm:$0xff] %vm923, %v921
    // Predicated region
    $region22: #{tpu_custom_call.1} parent=1 // pred_check
      _
    $region23: #{tpu_custom_call.1} parent=1 // pred_check_branch
      %926 = sbr.rel (0) target = $region25
    $region24: #{tpu_custom_call.1} parent=1 // pred_region
      %928 = vsyncadd [#allocation5], 0
      %s930 = sshll.u32 [#allocation4], 4
      %s931 = int_to_ptr.vmem [resolvable:$true] %s930
      %s932 = sshll.u32 %s5, 4
      %s933 = int_to_ptr.hbm [resolvable:$true] %s932
      %935 = dma.vmem_to_hbm [thread:$0]  %s931, 128, %s933, [#allocation5]
    $region25: #{tpu_custom_call.1} parent=1 // pred_fallthru
      _
    // Predicated region
    $region26: #{tpu_custom_call.1} parent=1 // pred_check
      _
    $region27: #{tpu_custom_call.1} parent=1 // pred_check_branch
      %937 = sbr.rel (0) target = $region29
    $region28: #{tpu_custom_call.1} parent=1 // pred_region
      %939 = dma.done [#allocation5], 128
    $region29: #{tpu_custom_call.1} parent=1 // pred_fallthru
      _
    %940 = vsyncpa [#allocation5], 1

</llo_original>
